<compile_context>
chip_gen: v7x
topology: tpu7x:2x2x1
jax: 0.10.0
libtpu: 0.0.40
codegen_flags: <defaults>
</compile_context>

<pallas_src>
import functools

import jax
import jax.numpy as jnp
from jax.experimental import pallas as pl
from jax.experimental.pallas import tpu as pltpu


# ------------------------------ small helpers ---------------------------------
def _round_up(n: int, m: int) -> int:
    return ((n + m - 1) // m) * m


def _pad_cols(a, width):
    return a if a.shape[-1] == width else jnp.pad(a, ((0, 0), (0, width - a.shape[-1])))


def _pad_rows(a, height):
    return a if a.shape[0] == height else jnp.pad(a, ((0, height - a.shape[0]), (0, 0)))


def _resident_spec(shape):
    """Grid-invariant (weight/bias) block: fetched once, kept VMEM-resident.

    Single-buffered (Buffered(1)) because its block index never changes across the
    grid, so double-buffering would only waste VMEM (critical on v7x's 64 MiB).
    """
    idx = lambda i: (0, 0)
    try:
        return pl.BlockSpec(shape, idx, pipeline_mode=pl.Buffered(1))
    except (TypeError, AttributeError):   # older Pallas without pipeline_mode
        return pl.BlockSpec(shape, idx)


# ----------------------------- Pallas kernels --------------------------------
def _pre_activation_kernel(x_ref, w1_ref, b1_ref, w2_ref, b2_ref, pre_ref, *,
                           compute_dtype):
    """return_pre_activation=True path: pre = relu(relu(x@W1+b1)@W2+b2).

    W3/b3 are never DMA'd and the final matmul is never issued. f32 refs are cast
    to the MXU compute dtype on the VPU in-kernel (no wrapper-side HBM copies).
    """
    x = x_ref[...].astype(compute_dtype)
    h1 = jnp.dot(x, w1_ref[...].astype(compute_dtype),
                 preferred_element_type=jnp.float32) + b1_ref[...]
    h1 = jnp.maximum(h1, 0.0).astype(compute_dtype)
    h2 = jnp.dot(h1, w2_ref[...].astype(compute_dtype),
                 preferred_element_type=jnp.float32) + b2_ref[...]
    pre_ref[...] = jnp.maximum(h2, 0.0).astype(pre_ref.dtype)


def _final_output_kernel(x_ref, w1_ref, b1_ref, w2_ref, b2_ref, w3_ref, b3_ref,
                         out_ref, *, compute_dtype):
    """return_pre_activation=False path: out = relu(relu(x@W1+b1)@W2+b2) @ W3 + b3.

    The (bb, H2) pre-activation stays in registers/VMEM and is never written to HBM.
    """
    x = x_ref[...].astype(compute_dtype)
    h1 = jnp.dot(x, w1_ref[...].astype(compute_dtype),
                 preferred_element_type=jnp.float32) + b1_ref[...]
    h1 = jnp.maximum(h1, 0.0).astype(compute_dtype)
    h2 = jnp.dot(h1, w2_ref[...].astype(compute_dtype),
                 preferred_element_type=jnp.float32) + b2_ref[...]
    h2 = jnp.maximum(h2, 0.0).astype(compute_dtype)
    out = jnp.dot(h2, w3_ref[...].astype(compute_dtype),
                  preferred_element_type=jnp.float32) + b3_ref[...]
    out_ref[...] = out.astype(out_ref.dtype)


# ------------------------------ wrapper ---------------------------------------
@functools.partial(
    jax.jit,
    static_argnames=("return_pre_activation", "block_b", "use_bf16",
                     "lane_multiple", "out_dtype"))
def modified_encoder_forward(x, params, return_pre_activation=False,
                             block_b=256, use_bf16=True, lane_multiple=128,
                             out_dtype=jnp.float32):
    """JAX wrapper mirroring ModifiedEncoder.forward (specialized at trace time).

    block_b: rows per grid step. Sweep 512-1024 on v5e/v6e (128 MiB VMEM);
    keep ~256 on v7x (64 MiB VMEM) -- the vmem_limit below is derived per call.
    out_dtype: dtype of the returned tensor; bf16 halves the pre-activation
    writeback if the downstream consumer tolerates it.
    """
    w1, b1, w2, b2, w3, b3 = params
    B, D_in = x.shape
    H1, H2, LATENT = w1.shape[1], w2.shape[1], w3.shape[1]

    compute_dtype = jnp.bfloat16 if use_bf16 else jnp.float32
    out_itemsize = jnp.dtype(out_dtype).itemsize

    # Zero-pad hidden/latent widths to lane-dense multiples (default 128). Only the
    # small weight/bias tensors are padded -- x is untouched -- and padded columns
    # are exact zeros, so results in the valid slice are unchanged (f32 bit-exact).
    lm = max(int(lane_multiple), 1)
    H1p, H2p, Lp = _round_up(H1, lm), _round_up(H2, lm), _round_up(LATENT, lm)

    w1p = _pad_cols(w1, H1p)
    b1p = _pad_cols(b1, H1p)
    w2p = _pad_cols(_pad_rows(w2, H1p), H2p)
    b2p = _pad_cols(b2, H2p)

    # Batch tiling: rows-per-step multiple of 8; force >= 2 grid steps whenever
    # B > 8 so the "parallel" axis can be sharded over v7x's 2 TensorCores.
    if B <= 8:
        bb = B
    else:
        bb = max(8, min(block_b, _round_up(pl.cdiv(B, 2), 8)))
    nb = pl.cdiv(B, bb)

    x_spec = pl.BlockSpec((bb, D_in), lambda i: (i, 0))

    def _compiler_params(weight_bytes, out_width):
        est = (weight_bytes                           # single-buffered f32 residents
               + 2 * bb * D_in * 4                    # double-buffered x tiles (f32)
               + 2 * bb * out_width * out_itemsize    # double-buffered output tiles
               + 4 * bb * (H1p + H2p) * 4)            # f32/bf16 intermediate headroom
        vmem_limit = int(min(max(est + (2 << 20), 8 << 20), 64 << 20))
        return pltpu.CompilerParams(
            dimension_semantics=("parallel",),
            vmem_limit_bytes=vmem_limit)

    if return_pre_activation:
        weight_bytes = sum(int(a.size) * 4 for a in (w1p, b1p, w2p, b2p))
        cost = pl.CostEstimate(
            flops=2 * B * (D_in * H1p + H1p * H2p),
            transcendentals=0,
            bytes_accessed=int(x.size) * 4 + weight_bytes + B * H2p * out_itemsize)

        pre = pl.pallas_call(
            functools.partial(_pre_activation_kernel, compute_dtype=compute_dtype),
            out_shape=jax.ShapeDtypeStruct((B, H2p), out_dtype),
            grid=(nb,),
            in_specs=[
                x_spec,
                _resident_spec((D_in, H1p)), _resident_spec((1, H1p)),
                _resident_spec((H1p, H2p)),  _resident_spec((1, H2p)),
            ],
            out_specs=pl.BlockSpec((bb, H2p), lambda i: (i, 0)),
            compiler_params=_compiler_params(weight_bytes, H2p),
            cost_estimate=cost,
        )(x, w1p, b1p, w2p, b2p)
        return pre[:, :H2] if H2p != H2 else pre

    w3p = _pad_cols(_pad_rows(w3, H2p), Lp)
    b3p = _pad_cols(b3, Lp)
    weight_bytes = sum(int(a.size) * 4 for a in (w1p, b1p, w2p, b2p, w3p, b3p))
    cost = pl.CostEstimate(
        flops=2 * B * (D_in * H1p + H1p * H2p + H2p * Lp),
        transcendentals=0,
        bytes_accessed=int(x.size) * 4 + weight_bytes + B * Lp * out_itemsize)

    out = pl.pallas_call(
        functools.partial(_final_output_kernel, compute_dtype=compute_dtype),
        out_shape=jax.ShapeDtypeStruct((B, Lp), out_dtype),
        grid=(nb,),
        in_specs=[
            x_spec,
            _resident_spec((D_in, H1p)), _resident_spec((1, H1p)),
            _resident_spec((H1p, H2p)),  _resident_spec((1, H2p)),
            _resident_spec((H2p, Lp)),   _resident_spec((1, Lp)),
        ],
        out_specs=pl.BlockSpec((bb, Lp), lambda i: (i, 0)),
        compiler_params=_compiler_params(weight_bytes, Lp),
        cost_estimate=cost,
    )(x, w1p, b1p, w2p, b2p, w3p, b3p)
    return out[:, :LATENT] if Lp != LATENT else out


# --------------------------- parameter init -----------------------------------
def init_params(key, d_in, h1, h2, latent):
    """Deterministic init matching torch.nn.Linear default (U[-1/sqrt(fan_in), +])."""
    def linear(k, fan_in, fan_out):
        kw, kb = jax.random.split(k)
        bound = 1.0 / jnp.sqrt(fan_in)
        w = jax.random.uniform(kw, (fan_in, fan_out), jnp.float32, -bound, bound)
        b = jax.random.uniform(kb, (1, fan_out), jnp.float32, -bound, bound)
        return w, b

    k1, k2, k3 = jax.random.split(key, 3)
    w1, b1 = linear(k1, d_in, h1)
    w2, b2 = linear(k2, h1, h2)
    w3, b3 = linear(k3, h2, latent)
    return (w1, b1, w2, b2, w3, b3)


# ------------------------------ reference -------------------------------------
def reference_forward(x, params, return_pre_activation=False):
    w1, b1, w2, b2, w3, b3 = params
    h = jnp.maximum(x @ w1 + b1, 0.0)
    h = jnp.maximum(h @ w2 + b2, 0.0)
    if return_pre_activation:
        return h
    return h @ w3 + b3


if __name__ == "__main__":
    B, D_IN, H1, H2, LATENT = 8, 64, 32, 32, 16

    key = jax.random.PRNGKey(0)
    kx, kp = jax.random.split(key)
    x = jax.random.normal(kx, (B, D_IN), jnp.float32)
    params = init_params(kp, D_IN, H1, H2, LATENT)

    out_ref = reference_forward(x, params, False)
    pre_ref = reference_forward(x, params, True)

    # f32 compute path (bit-exact vs reference, padding columns are zeros)
    out_f32 = jax.block_until_ready(
        modified_encoder_forward(x, params, return_pre_activation=False, use_bf16=False))
    pre_f32 = jax.block_until_ready(
        modified_encoder_forward(x, params, return_pre_activation=True, use_bf16=False))

    assert out_f32.shape == (B, LATENT)
    assert pre_f32.shape == (B, H2)
    assert jnp.allclose(out_f32, out_ref, atol=1e-5, rtol=1e-5)
    assert jnp.allclose(pre_f32, pre_ref, atol=1e-5, rtol=1e-5)

    # bf16-operand / f32-accumulate path (MXU-native; looser tolerance)
    out_bf16 = jax.block_until_ready(
        modified_encoder_forward(x, params, return_pre_activation=False, use_bf16=True))
    pre_bf16 = jax.block_until_ready(
        modified_encoder_forward(x, params, return_pre_activation=True, use_bf16=True))

    assert out_bf16.shape == (B, LATENT)
    assert pre_bf16.shape == (B, H2)
    assert jnp.allclose(out_bf16, out_ref, atol=3e-2, rtol=3e-2)
    assert jnp.allclose(pre_bf16, pre_ref, atol=3e-2, rtol=3e-2)

    print("KERNEL_OK")
</pallas_src>

<mosaic_0001>
module attributes {stable_mosaic.version = 11 : i64} {
  func.func @_final_output_kernel(%arg0: i32, %arg1: memref<8x64xf32, #tpu.memory_space<vmem>>, %arg2: memref<64x128xf32, #tpu.memory_space<vmem>>, %arg3: memref<1x128xf32, #tpu.memory_space<vmem>>, %arg4: memref<128x128xf32, #tpu.memory_space<vmem>>, %arg5: memref<1x128xf32, #tpu.memory_space<vmem>>, %arg6: memref<128x128xf32, #tpu.memory_space<vmem>>, %arg7: memref<1x128xf32, #tpu.memory_space<vmem>>, %arg8: memref<8x128xf32, #tpu.memory_space<vmem>>) attributes {dimension_semantics = [#tpu.dimension_semantics<parallel>], iteration_bounds = array<i64: 1>, scalar_prefetch = 0 : i64, scratch_operands = 0 : i64, tpu.core_type = #tpu.core_type<tc>, window_params = [{transform_indices = @transform_0, window_bounds = array<i64: 8, 64>}, {pipeline_mode = #tpu.pipeline_mode<synchronous>, transform_indices = @transform_1, window_bounds = array<i64: 64, 128>}, {pipeline_mode = #tpu.pipeline_mode<synchronous>, transform_indices = @transform_2, window_bounds = array<i64: 1, 128>}, {pipeline_mode = #tpu.pipeline_mode<synchronous>, transform_indices = @transform_3, window_bounds = array<i64: 128, 128>}, {pipeline_mode = #tpu.pipeline_mode<synchronous>, transform_indices = @transform_4, window_bounds = array<i64: 1, 128>}, {pipeline_mode = #tpu.pipeline_mode<synchronous>, transform_indices = @transform_5, window_bounds = array<i64: 128, 128>}, {pipeline_mode = #tpu.pipeline_mode<synchronous>, transform_indices = @transform_6, window_bounds = array<i64: 1, 128>}, {transform_indices = @transform_7, window_bounds = array<i64: 8, 128>}]} {
    %c0 = arith.constant 0 : index
    %c0_0 = arith.constant 0 : index
    %0 = vector.load %arg1[%c0, %c0_0] : memref<8x64xf32, #tpu.memory_space<vmem>>, vector<8x64xf32>
    %c0_1 = arith.constant 0 : index
    %c0_2 = arith.constant 0 : index
    %1 = vector.load %arg2[%c0_1, %c0_2] : memref<64x128xf32, #tpu.memory_space<vmem>>, vector<64x128xf32>
    %cst = arith.constant dense<0.000000e+00> : vector<8x128xf32>
    %2 = tpu.matmul %0, %1, %cst {dimension_numbers = #tpu.dot_dimension_numbers<[1], [0], [0], [1], [0, 0, 1, 1], [], []>} : vector<8x64xf32>, vector<64x128xf32>, vector<8x128xf32> -> vector<8x128xf32>
    %c0_3 = arith.constant 0 : index
    %c0_4 = arith.constant 0 : index
    %3 = vector.load %arg3[%c0_3, %c0_4] : memref<1x128xf32, #tpu.memory_space<vmem>>, vector<1x128xf32>
    %4 = vector.broadcast %3 : vector<1x128xf32> to vector<8x128xf32>
    %5 = arith.addf %2, %4 : vector<8x128xf32>
    %cst_5 = arith.constant 0.000000e+00 : f32
    %6 = vector.broadcast %cst_5 : f32 to vector<8x128xf32>
    %7 = arith.maximumf %5, %6 : vector<8x128xf32>
    %c0_6 = arith.constant 0 : index
    %c0_7 = arith.constant 0 : index
    %8 = vector.load %arg4[%c0_6, %c0_7] : memref<128x128xf32, #tpu.memory_space<vmem>>, vector<128x128xf32>
    %cst_8 = arith.constant dense<0.000000e+00> : vector<8x128xf32>
    %9 = tpu.matmul %7, %8, %cst_8 {dimension_numbers = #tpu.dot_dimension_numbers<[1], [0], [0], [1], [0, 0, 1, 1], [], []>} : vector<8x128xf32>, vector<128x128xf32>, vector<8x128xf32> -> vector<8x128xf32>
    %c0_9 = arith.constant 0 : index
    %c0_10 = arith.constant 0 : index
    %10 = vector.load %arg5[%c0_9, %c0_10] : memref<1x128xf32, #tpu.memory_space<vmem>>, vector<1x128xf32>
    %11 = vector.broadcast %10 : vector<1x128xf32> to vector<8x128xf32>
    %12 = arith.addf %9, %11 : vector<8x128xf32>
    %cst_11 = arith.constant 0.000000e+00 : f32
    %13 = vector.broadcast %cst_11 : f32 to vector<8x128xf32>
    %14 = arith.maximumf %12, %13 : vector<8x128xf32>
    %c0_12 = arith.constant 0 : index
    %c0_13 = arith.constant 0 : index
    %15 = vector.load %arg6[%c0_12, %c0_13] : memref<128x128xf32, #tpu.memory_space<vmem>>, vector<128x128xf32>
    %cst_14 = arith.constant dense<0.000000e+00> : vector<8x128xf32>
    %16 = tpu.matmul %14, %15, %cst_14 {dimension_numbers = #tpu.dot_dimension_numbers<[1], [0], [0], [1], [0, 0, 1, 1], [], []>} : vector<8x128xf32>, vector<128x128xf32>, vector<8x128xf32> -> vector<8x128xf32>
    %c0_15 = arith.constant 0 : index
    %c0_16 = arith.constant 0 : index
    %17 = vector.load %arg7[%c0_15, %c0_16] : memref<1x128xf32, #tpu.memory_space<vmem>>, vector<1x128xf32>
    %18 = vector.broadcast %17 : vector<1x128xf32> to vector<8x128xf32>
    %19 = arith.addf %16, %18 : vector<8x128xf32>
    %c0_17 = arith.constant 0 : index
    %c0_18 = arith.constant 0 : index
    %20 = vector.load %arg8[%c0_17, %c0_18] : memref<8x128xf32, #tpu.memory_space<vmem>>, vector<8x128xf32>
    tpu.vector_store %arg8[%c0_17, %c0_18], %19 {strides = array<i32>} : memref<8x128xf32, #tpu.memory_space<vmem>>, vector<8x128xf32>,
    return
  }
  func.func @transform_0(%arg0: i32) -> (i32, i32) {
    %c0_i32 = arith.constant 0 : i32
    %c0_i32_0 = arith.constant 0 : i32
    return %arg0, %c0_i32 : i32, i32
  }
  func.func @transform_1(%arg0: i32) -> (i32, i32) {
    %c0_i32 = arith.constant 0 : i32
    %c0_i32_0 = arith.constant 0 : i32
    %c0_i32_1 = arith.constant 0 : i32
    return %c0_i32, %c0_i32_0 : i32, i32
  }
  func.func @transform_2(%arg0: i32) -> (i32, i32) {
    %c0_i32 = arith.constant 0 : i32
    %c0_i32_0 = arith.constant 0 : i32
    %c0_i32_1 = arith.constant 0 : i32
    return %c0_i32, %c0_i32_0 : i32, i32
  }
  func.func @transform_3(%arg0: i32) -> (i32, i32) {
    %c0_i32 = arith.constant 0 : i32
    %c0_i32_0 = arith.constant 0 : i32
    %c0_i32_1 = arith.constant 0 : i32
    return %c0_i32, %c0_i32_0 : i32, i32
  }
  func.func @transform_4(%arg0: i32) -> (i32, i32) {
    %c0_i32 = arith.constant 0 : i32
    %c0_i32_0 = arith.constant 0 : i32
    %c0_i32_1 = arith.constant 0 : i32
    return %c0_i32, %c0_i32_0 : i32, i32
  }
  func.func @transform_5(%arg0: i32) -> (i32, i32) {
    %c0_i32 = arith.constant 0 : i32
    %c0_i32_0 = arith.constant 0 : i32
    %c0_i32_1 = arith.constant 0 : i32
    return %c0_i32, %c0_i32_0 : i32, i32
  }
  func.func @transform_6(%arg0: i32) -> (i32, i32) {
    %c0_i32 = arith.constant 0 : i32
    %c0_i32_0 = arith.constant 0 : i32
    %c0_i32_1 = arith.constant 0 : i32
    return %c0_i32, %c0_i32_0 : i32, i32
  }
  func.func @transform_7(%arg0: i32) -> (i32, i32) {
    %c0_i32 = arith.constant 0 : i32
    %c0_i32_0 = arith.constant 0 : i32
    return %arg0, %c0_i32 : i32, i32
  }
}

</mosaic_0001>

<llo_original>
// kernel: modified_encoder_forward.1
$region0: #{modified_encoder_forward.1}
  #allocation0 [shape = 'u32[]', space=smem, size = 0x4, offset = 0x4, fixed_abs, tag = 'smem constant byte address 0x4 - core index']
  #allocation1 [shape = 'u32[144,128]{1,0:T(1,128)}', space=vmem, size = 0x12000, scoped, tag = 'internal scratch']
  %s0 = inlined_call_operand.vmem [shape: f32[8,64], index: 0, kind: input, shape index: {}]
  %s1 = inlined_call_operand.vmem [shape: f32[64,128], index: 1, kind: input, shape index: {}]
  %s2 = inlined_call_operand.vmem [shape: f32[1,128], index: 2, kind: input, shape index: {}]
  %s3 = inlined_call_operand.vmem [shape: f32[128,128], index: 3, kind: input, shape index: {}]
  %s4 = inlined_call_operand.vmem [shape: f32[1,128], index: 4, kind: input, shape index: {}]
  %s5 = inlined_call_operand.vmem [shape: f32[128,128], index: 5, kind: input, shape index: {}]
  %s6 = inlined_call_operand.vmem [shape: f32[1,128], index: 6, kind: input, shape index: {}]
  %s7 = inlined_call_operand.hbm [shape: f32[8,128], index: 7, kind: output, shape index: {}]
  %s8 = sld [smem:[#allocation0]]
  $region38: #{modified_encoder_forward.1} parent=0
    _
  %s10 = ssub.s32 1, %s8
  %s11 = scalar_select 0, %s10, %s8
  $region1: #{modified_encoder_forward.1} parent=0
    #allocation2 [shape = 'u8[4096]{0}', space=vmem, size = 0x1000, scoped, tag = 'output window, operand 0, single buffered']
    #allocation3 [shape = 's32[1]{0}', space=sflag, size = 0x4, scoped, tag = 'scoped memory for modified_encoder_forward.1']
    %12 = vsyncpa [#allocation3], 0
    // Predicated region
    $region2: #{modified_encoder_forward.1} parent=1 // pred_check
      _
    $region3: #{modified_encoder_forward.1} parent=1 // pred_check_branch
      %14 = sbr.rel (0) target = $region5
    $region4: #{modified_encoder_forward.1} parent=1 // pred_region
      _
    $region5: #{modified_encoder_forward.1} parent=1 // pred_fallthru
      _
    // Predicated region
    $region6: #{modified_encoder_forward.1} parent=1 // pred_check
      _
    $region7: #{modified_encoder_forward.1} parent=1 // pred_check_branch
      %16 = sbr.rel (0) target = $region9
    $region8: #{modified_encoder_forward.1} parent=1 // pred_region
      _
    $region9: #{modified_encoder_forward.1} parent=1 // pred_fallthru
      _
    // Predicated region
    $region10: #{modified_encoder_forward.1} parent=1 // pred_check
      _
    $region11: #{modified_encoder_forward.1} parent=1 // pred_check_branch
      %18 = sbr.rel (0) target = $region13
    $region12: #{modified_encoder_forward.1} parent=1 // pred_region
      _
    $region13: #{modified_encoder_forward.1} parent=1 // pred_fallthru
      _
    // Predicated region
    $region14: #{modified_encoder_forward.1} parent=1 // pred_check
      _
    $region15: #{modified_encoder_forward.1} parent=1 // pred_check_branch
      %20 = sbr.rel (0) target = $region17
    $region16: #{modified_encoder_forward.1} parent=1 // pred_region
      _
    $region17: #{modified_encoder_forward.1} parent=1 // pred_fallthru
      _
    // Predicated region
    $region18: #{modified_encoder_forward.1} parent=1 // pred_check
      _
    $region19: #{modified_encoder_forward.1} parent=1 // pred_check_branch
      %22 = sbr.rel (0) target = $region21
    $region20: #{modified_encoder_forward.1} parent=1 // pred_region
      _
    $region21: #{modified_encoder_forward.1} parent=1 // pred_fallthru
      _
    // Predicated region
    $region22: #{modified_encoder_forward.1} parent=1 // pred_check
      _
    $region23: #{modified_encoder_forward.1} parent=1 // pred_check_branch
      %24 = sbr.rel (0) target = $region25
    $region24: #{modified_encoder_forward.1} parent=1 // pred_region
      _
    $region25: #{modified_encoder_forward.1} parent=1 // pred_fallthru
      _
    // Predicated region
    $region26: #{modified_encoder_forward.1} parent=1 // pred_check
      _
    $region27: #{modified_encoder_forward.1} parent=1 // pred_check_branch
      %26 = sbr.rel (0) target = $region29
    $region28: #{modified_encoder_forward.1} parent=1 // pred_region
      _
    $region29: #{modified_encoder_forward.1} parent=1 // pred_fallthru
      _
    %v27 = vld [vmem:[%s0] sm:$0xff]
    %v28 = vld [vmem:[%s1] sm:$0xff]
    %v29 = vld [vmem:[%s1 + $0x8] sm:$0xff]
    %v30 = vld [vmem:[%s1 + $0x10] sm:$0xff]
    %v31 = vld [vmem:[%s1 + $0x18] sm:$0xff]
    %v32 = vld [vmem:[%s1 + $0x20] sm:$0xff]
    %v33 = vld [vmem:[%s1 + $0x28] sm:$0xff]
    %v34 = vld [vmem:[%s1 + $0x30] sm:$0xff]
    %v35 = vld [vmem:[%s1 + $0x38] sm:$0xff]
    %v36 = vld [vmem:[%s2] sm:$0x1]
    %v38 = vlaneseq
    %v39 = vshrl.u32 %v38, 7
    %v40 = vsub.s32 0, %v39
    %v41 = vrot.slane %v36, %v40
    %vm43 = vcmask 523264
    %v45 = vsel %vm43, %v27, 0
    %47 = vmatprep.subr.mxu0 0.0
    %48 = vmatpush1.msra.mxu0 %v28
    %49 = vmatprep.subr.mxu0 0.0
    %50 = vmatpush1.msra.mxu0 %v29
    %51 = vmatprep.subr.mxu0 0.0
    %52 = vmatpush1.msra.mxu0 %v30
    %53 = vmatprep.subr.mxu0 0.0
    %54 = vmatpush1.msra.mxu0 %v31
    %55 = vmatprep.subr.mxu0 0.0
    %56 = vmatpush1.msra.mxu0 %v32
    %57 = vmatprep.subr.mxu0 0.0
    %58 = vmatpush1.msra.mxu0 %v33
    %59 = vmatprep.subr.mxu0 0.0
    %60 = vmatpush1.msra.mxu0 %v34
    %61 = vmatprep.subr.mxu0 0.0
    %62 = vmatpush1.msra.mxu0 %v35
    %63 = vmatprep.subr.mxu0 0.0
    %64 = vmatpush1.msra.mxu0 0.0
    %65 = vmatprep.subr.mxu0 0.0
    %66 = vmatpush1.msra.mxu0 0.0
    %67 = vmatprep.subr.mxu0 0.0
    %68 = vmatpush1.msra.mxu0 0.0
    %69 = vmatprep.subr.mxu0 0.0
    %70 = vmatpush1.msra.mxu0 0.0
    %71 = vmatprep.subr.mxu0 0.0
    %72 = vmatpush1.msra.mxu0 0.0
    %73 = vmatprep.subr.mxu0 0.0
    %74 = vmatpush1.msra.mxu0 0.0
    %75 = vmatprep.subr.mxu0 0.0
    %76 = vmatpush1.msra.mxu0 0.0
    %77 = vmatprep.subr.mxu0 0.0
    %78 = vmatpush1.msra.mxu0 0.0
    %79 = vmatprep.subr.mxu0 0.0
    %80 = vmatpush1.msra.mxu0 0.0
    %81 = vmatprep.subr.mxu0 0.0
    %82 = vmatpush1.msra.mxu0 0.0
    %83 = vmatprep.subr.mxu0 0.0
    %84 = vmatpush1.msra.mxu0 0.0
    %85 = vmatprep.subr.mxu0 0.0
    %86 = vmatpush1.msra.mxu0 0.0
    %87 = vmatprep.subr.mxu0 0.0
    %88 = vmatpush1.msra.mxu0 0.0
    %89 = vmatprep.subr.mxu0 0.0
    %90 = vmatpush1.msra.mxu0 0.0
    %91 = vmatprep.subr.mxu0 0.0
    %92 = vmatpush1.msra.mxu0 0.0
    %93 = vmatprep.subr.mxu0 0.0
    %94 = vmatpush1.msra.mxu0 0.0
    %95 = vmatprep.subr.mxu0 0.0
    %96 = vmatpush1.msra.mxu0 0.0
    %97 = vmatprep.subr.mxu0 0.0
    %98 = vmatpush1.msra.mxu0 0.0
    %99 = vmatprep.subr.mxu0 0.0
    %100 = vmatpush1.msra.mxu0 0.0
    %101 = vmatprep.subr.mxu0 0.0
    %102 = vmatpush1.msra.mxu0 0.0
    %103 = vmatprep.subr.mxu0 0.0
    %104 = vmatpush1.msra.mxu0 0.0
    %105 = vmatprep.subr.mxu0 0.0
    %106 = vmatpush1.msra.mxu0 0.0
    %107 = vmatprep.subr.mxu0 0.0
    %108 = vmatpush1.msra.mxu0 0.0
    %109 = vmatprep.subr.mxu0 0.0
    %110 = vmatpush1.msra.mxu0 0.0
    %111 = vmatprep.mubr.f32.mxu0 0.0
    %112 = vmatmul.mubr.f32.gmra.mrb[0].mxu0 %v45
    %v113 = vpop.f32.mrb[0].mxu0
    %v114 = vadd.f32 %v41, %v113
    %v115 = vpop.f32.mrb[0].mxu0
    %116 = vdwg.mxu0
    %v117 = vmax.f32 %v114, 0.0
    %v118 = vld [vmem:[%s3] sm:$0xff]
    %v119 = vld [vmem:[%s3 + $0x8] sm:$0xff]
    %v120 = vld [vmem:[%s3 + $0x10] sm:$0xff]
    %v121 = vld [vmem:[%s3 + $0x18] sm:$0xff]
    %v122 = vld [vmem:[%s3 + $0x20] sm:$0xff]
    %v123 = vld [vmem:[%s3 + $0x28] sm:$0xff]
    %v124 = vld [vmem:[%s3 + $0x30] sm:$0xff]
    %v125 = vld [vmem:[%s3 + $0x38] sm:$0xff]
    %v126 = vld [vmem:[%s3 + $0x40] sm:$0xff]
    %v127 = vld [vmem:[%s3 + $0x48] sm:$0xff]
    %v128 = vld [vmem:[%s3 + $0x50] sm:$0xff]
    %v129 = vld [vmem:[%s3 + $0x58] sm:$0xff]
    %v130 = vld [vmem:[%s3 + $0x60] sm:$0xff]
    %v131 = vld [vmem:[%s3 + $0x68] sm:$0xff]
    %v132 = vld [vmem:[%s3 + $0x70] sm:$0xff]
    %v133 = vld [vmem:[%s3 + $0x78] sm:$0xff]
    %v134 = vld [vmem:[%s4] sm:$0x1]
    %v136 = vlaneseq
    %v137 = vshrl.u32 %v136, 7
    %v138 = vsub.s32 0, %v137
    %v139 = vrot.slane %v134, %v138
    %141 = vmatprep.subr.mxu0 0.0
    %142 = vmatpush1.msra.mxu0 %v118
    %143 = vmatprep.subr.mxu0 0.0
    %144 = vmatpush1.msra.mxu0 %v119
    %145 = vmatprep.subr.mxu0 0.0
    %146 = vmatpush1.msra.mxu0 %v120
    %147 = vmatprep.subr.mxu0 0.0
    %148 = vmatpush1.msra.mxu0 %v121
    %149 = vmatprep.subr.mxu0 0.0
    %150 = vmatpush1.msra.mxu0 %v122
    %151 = vmatprep.subr.mxu0 0.0
    %152 = vmatpush1.msra.mxu0 %v123
    %153 = vmatprep.subr.mxu0 0.0
    %154 = vmatpush1.msra.mxu0 %v124
    %155 = vmatprep.subr.mxu0 0.0
    %156 = vmatpush1.msra.mxu0 %v125
    %157 = vmatprep.subr.mxu0 0.0
    %158 = vmatpush1.msra.mxu0 %v126
    %159 = vmatprep.subr.mxu0 0.0
    %160 = vmatpush1.msra.mxu0 %v127
    %161 = vmatprep.subr.mxu0 0.0
    %162 = vmatpush1.msra.mxu0 %v128
    %163 = vmatprep.subr.mxu0 0.0
    %164 = vmatpush1.msra.mxu0 %v129
    %165 = vmatprep.subr.mxu0 0.0
    %166 = vmatpush1.msra.mxu0 %v130
    %167 = vmatprep.subr.mxu0 0.0
    %168 = vmatpush1.msra.mxu0 %v131
    %169 = vmatprep.subr.mxu0 0.0
    %170 = vmatpush1.msra.mxu0 %v132
    %171 = vmatprep.subr.mxu0 0.0
    %172 = vmatpush1.msra.mxu0 %v133
    %173 = vmatprep.subr.mxu0 0.0
    %174 = vmatpush1.msra.mxu0 0.0
    %175 = vmatprep.subr.mxu0 0.0
    %176 = vmatpush1.msra.mxu0 0.0
    %177 = vmatprep.subr.mxu0 0.0
    %178 = vmatpush1.msra.mxu0 0.0
    %179 = vmatprep.subr.mxu0 0.0
    %180 = vmatpush1.msra.mxu0 0.0
    %181 = vmatprep.subr.mxu0 0.0
    %182 = vmatpush1.msra.mxu0 0.0
    %183 = vmatprep.subr.mxu0 0.0
    %184 = vmatpush1.msra.mxu0 0.0
    %185 = vmatprep.subr.mxu0 0.0
    %186 = vmatpush1.msra.mxu0 0.0
    %187 = vmatprep.subr.mxu0 0.0
    %188 = vmatpush1.msra.mxu0 0.0
    %189 = vmatprep.subr.mxu0 0.0
    %190 = vmatpush1.msra.mxu0 0.0
    %191 = vmatprep.subr.mxu0 0.0
    %192 = vmatpush1.msra.mxu0 0.0
    %193 = vmatprep.subr.mxu0 0.0
    %194 = vmatpush1.msra.mxu0 0.0
    %195 = vmatprep.subr.mxu0 0.0
    %196 = vmatpush1.msra.mxu0 0.0
    %197 = vmatprep.subr.mxu0 0.0
    %198 = vmatpush1.msra.mxu0 0.0
    %199 = vmatprep.subr.mxu0 0.0
    %200 = vmatpush1.msra.mxu0 0.0
    %201 = vmatprep.subr.mxu0 0.0
    %202 = vmatpush1.msra.mxu0 0.0
    %203 = vmatprep.subr.mxu0 0.0
    %204 = vmatpush1.msra.mxu0 0.0
    %205 = vmatprep.mubr.f32.mxu0 0.0
    %206 = vmatmul.mubr.f32.gmra.mrb[0].mxu0 %v117
    %v207 = vpop.f32.mrb[0].mxu0
    %v208 = vadd.f32 %v139, %v207
    %v209 = vpop.f32.mrb[0].mxu0
    %210 = vdwg.mxu0
    %v211 = vmax.f32 %v208, 0.0
    %v212 = vld [vmem:[%s5] sm:$0xff]
    %v213 = vld [vmem:[%s5 + $0x8] sm:$0xff]
    %v214 = vld [vmem:[%s5 + $0x10] sm:$0xff]
    %v215 = vld [vmem:[%s5 + $0x18] sm:$0xff]
    %v216 = vld [vmem:[%s5 + $0x20] sm:$0xff]
    %v217 = vld [vmem:[%s5 + $0x28] sm:$0xff]
    %v218 = vld [vmem:[%s5 + $0x30] sm:$0xff]
    %v219 = vld [vmem:[%s5 + $0x38] sm:$0xff]
    %v220 = vld [vmem:[%s5 + $0x40] sm:$0xff]
    %v221 = vld [vmem:[%s5 + $0x48] sm:$0xff]
    %v222 = vld [vmem:[%s5 + $0x50] sm:$0xff]
    %v223 = vld [vmem:[%s5 + $0x58] sm:$0xff]
    %v224 = vld [vmem:[%s5 + $0x60] sm:$0xff]
    %v225 = vld [vmem:[%s5 + $0x68] sm:$0xff]
    %v226 = vld [vmem:[%s5 + $0x70] sm:$0xff]
    %v227 = vld [vmem:[%s5 + $0x78] sm:$0xff]
    %v228 = vld [vmem:[%s6] sm:$0x1]
    %v230 = vlaneseq
    %v231 = vshrl.u32 %v230, 7
    %v232 = vsub.s32 0, %v231
    %v233 = vrot.slane %v228, %v232
    %235 = vmatprep.subr.mxu0 0.0
    %236 = vmatpush1.msra.mxu0 %v212
    %237 = vmatprep.subr.mxu0 0.0
    %238 = vmatpush1.msra.mxu0 %v213
    %239 = vmatprep.subr.mxu0 0.0
    %240 = vmatpush1.msra.mxu0 %v214
    %241 = vmatprep.subr.mxu0 0.0
    %242 = vmatpush1.msra.mxu0 %v215
    %243 = vmatprep.subr.mxu0 0.0
    %244 = vmatpush1.msra.mxu0 %v216
    %245 = vmatprep.subr.mxu0 0.0
    %246 = vmatpush1.msra.mxu0 %v217
    %247 = vmatprep.subr.mxu0 0.0
    %248 = vmatpush1.msra.mxu0 %v218
    %249 = vmatprep.subr.mxu0 0.0
    %250 = vmatpush1.msra.mxu0 %v219
    %251 = vmatprep.subr.mxu0 0.0
    %252 = vmatpush1.msra.mxu0 %v220
    %253 = vmatprep.subr.mxu0 0.0
    %254 = vmatpush1.msra.mxu0 %v221
    %255 = vmatprep.subr.mxu0 0.0
    %256 = vmatpush1.msra.mxu0 %v222
    %257 = vmatprep.subr.mxu0 0.0
    %258 = vmatpush1.msra.mxu0 %v223
    %259 = vmatprep.subr.mxu0 0.0
    %260 = vmatpush1.msra.mxu0 %v224
    %261 = vmatprep.subr.mxu0 0.0
    %262 = vmatpush1.msra.mxu0 %v225
    %263 = vmatprep.subr.mxu0 0.0
    %264 = vmatpush1.msra.mxu0 %v226
    %265 = vmatprep.subr.mxu0 0.0
    %266 = vmatpush1.msra.mxu0 %v227
    %267 = vmatprep.subr.mxu0 0.0
    %268 = vmatpush1.msra.mxu0 0.0
    %269 = vmatprep.subr.mxu0 0.0
    %270 = vmatpush1.msra.mxu0 0.0
    %271 = vmatprep.subr.mxu0 0.0
    %272 = vmatpush1.msra.mxu0 0.0
    %273 = vmatprep.subr.mxu0 0.0
    %274 = vmatpush1.msra.mxu0 0.0
    %275 = vmatprep.subr.mxu0 0.0
    %276 = vmatpush1.msra.mxu0 0.0
    %277 = vmatprep.subr.mxu0 0.0
    %278 = vmatpush1.msra.mxu0 0.0
    %279 = vmatprep.subr.mxu0 0.0
    %280 = vmatpush1.msra.mxu0 0.0
    %281 = vmatprep.subr.mxu0 0.0
    %282 = vmatpush1.msra.mxu0 0.0
    %283 = vmatprep.subr.mxu0 0.0
    %284 = vmatpush1.msra.mxu0 0.0
    %285 = vmatprep.subr.mxu0 0.0
    %286 = vmatpush1.msra.mxu0 0.0
    %287 = vmatprep.subr.mxu0 0.0
    %288 = vmatpush1.msra.mxu0 0.0
    %289 = vmatprep.subr.mxu0 0.0
    %290 = vmatpush1.msra.mxu0 0.0
    %291 = vmatprep.subr.mxu0 0.0
    %292 = vmatpush1.msra.mxu0 0.0
    %293 = vmatprep.subr.mxu0 0.0
    %294 = vmatpush1.msra.mxu0 0.0
    %295 = vmatprep.subr.mxu0 0.0
    %296 = vmatpush1.msra.mxu0 0.0
    %297 = vmatprep.subr.mxu0 0.0
    %298 = vmatpush1.msra.mxu0 0.0
    %299 = vmatprep.mubr.f32.mxu0 0.0
    %300 = vmatmul.mubr.f32.gmra.mrb[0].mxu0 %v211
    %v301 = vpop.f32.mrb[0].mxu0
    %v302 = vadd.f32 %v233, %v301
    %v303 = vpop.f32.mrb[0].mxu0
    %304 = vdwg.mxu0
    %305 = vst [vmem:[#allocation2] sm:$0xff] %v302
    // Predicated region
    $region30: #{modified_encoder_forward.1} parent=1 // pred_check
      _
    $region31: #{modified_encoder_forward.1} parent=1 // pred_check_branch
      %307 = sbr.rel (0) target = $region33
    $region32: #{modified_encoder_forward.1} parent=1 // pred_region
      %s309 = ssub.s32 128, 128
      %310 = vsyncadd [#allocation3], %s309
      %s312 = sshll.u32 [#allocation2], 4
      %s313 = int_to_ptr.vmem [resolvable:$true] %s312
      %315 = dma.vmem_to_hbm [thread:$0]  %s313, 128, %s7, [#allocation3]
    $region33: #{modified_encoder_forward.1} parent=1 // pred_fallthru
      _
    // Predicated region
    $region34: #{modified_encoder_forward.1} parent=1 // pred_check
      _
    $region35: #{modified_encoder_forward.1} parent=1 // pred_check_branch
      %317 = sbr.rel (0) target = $region37
    $region36: #{modified_encoder_forward.1} parent=1 // pred_region
      %318 = dma.done [#allocation3], 128
    $region37: #{modified_encoder_forward.1} parent=1 // pred_fallthru
      _
    %319 = vsyncpa [#allocation3], 1

</llo_original>
